<compile_context>
chip_gen: v7x
topology: tpu7x:2x2x1
jax: 0.10.0
libtpu: 0.0.40
codegen_flags: <defaults>
</compile_context>

<pallas_src>
import jax
import jax.numpy as jnp
from jax.experimental import pallas as pl
from jax.experimental.pallas import tpu as pltpu

LANES = 128
SUBLANES = 8
HIDDEN = 10


def phi_kernel(x_ref, w1_ref, b1_ref, w2_ref, b2_ref, o_ref):
    # x_ref: (tile_rows, 128) lane-dense slab of the flattened batch, VMEM.
    # w1_ref, b1_ref, w2_ref: (10,) f32 in SMEM; b2_ref: (1,) f32 in SMEM.
    # o_ref: (tile_rows, 128) output slab.
    x = x_ref[...]
    # y = relu( b2 + sum_j relu(x * w1[j] + b1[j]) * w2[j] )
    # Seed the accumulator with the j=0 term + b2: saves a zeros-init add and
    # the trailing '+ b2' (VALU is the saturated slot on v5e/v6e/v7x).
    acc = jnp.maximum(x * w1_ref[0] + b1_ref[0], 0.0) * w2_ref[0] + b2_ref[0]
    # Single accumulation chain; a 2-chain ILP split would add an extra vadd
    # and was left out pending a bundle-dump check (review: keep only if the
    # VALU slots are measurably under-filled).
    for j in range(1, HIDDEN):
        h = jnp.maximum(x * w1_ref[j] + b1_ref[j], 0.0)   # ReLU after ln1
        acc = acc + h * w2_ref[j]
    o_ref[...] = jnp.maximum(acc, 0.0).astype(o_ref.dtype)  # ReLU after ln2


def _round_up(a, m):
    return ((a + m - 1) // m) * m


def phi_reference(x, w1, b1, w2, b2):
    h = jnp.maximum(x @ w1.reshape(1, HIDDEN) + b1.reshape(1, HIDDEN), 0.0)
    return jnp.maximum(h @ w2.reshape(HIDDEN, 1) + b2.reshape(1, 1), 0.0)


def phi_forward(x, w1, b1, w2, b2, *, max_block_rows=2048,
                min_pallas_batch=16384):
    """x: (B, 1) f32 -> (B, 1) f32.

    w1, b1, w2: flat (10,) vectors; b2: (1,). Computes
    relu(relu(x @ W1 + b1) @ W2 + b2) with W1 = w1[None, :], W2 = w2[:, None].
    """
    B = x.shape[0]
    dtype = x.dtype

    # Tiny batches: a fused XLA elementwise graph beats any Pallas launch
    # (fixed launch cost dominates). No effect on large-B throughput.
    if B < min_pallas_batch:
        return phi_reference(x, w1, b1, w2, b2)

    # Fold the batch into the 128-lane axis. Pad only to a multiple of 128
    # lanes; when B is already a multiple of 128 there is no pad and no slice
    # (no extra HBM round trips outside the kernel).
    rows = pl.cdiv(B, LANES)
    padded = rows * LANES
    needs_pad = padded != B
    if needs_pad:
        x_slab = jnp.pad(x.reshape(-1), (0, padded - B)).reshape(rows, LANES)
    else:
        x_slab = x.reshape(rows, LANES)

    # Row tile: sublane-aligned, capped at max_block_rows (1 MiB f32 block),
    # but sized for >= ~4 grid steps so v7x's two TensorCores both get work.
    if rows <= SUBLANES:
        tile_rows = rows                      # single block == full array
    else:
        target = pl.cdiv(rows, 4)
        tile_rows = max(SUBLANES,
                        min(max_block_rows, _round_up(target, SUBLANES)))
    grid = (pl.cdiv(rows, tile_rows),)        # Pallas masks the partial block

    out_slab = pl.pallas_call(
        phi_kernel,
        out_shape=jax.ShapeDtypeStruct((rows, LANES), dtype),
        grid_spec=pltpu.PrefetchScalarGridSpec(
            num_scalar_prefetch=0,
            grid=grid,
            in_specs=[
                pl.BlockSpec((tile_rows, LANES), lambda i: (i, 0)),    # x slab
                pl.BlockSpec(memory_space=pltpu.MemorySpace.SMEM),     # w1 (10,)
                pl.BlockSpec(memory_space=pltpu.MemorySpace.SMEM),     # b1 (10,)
                pl.BlockSpec(memory_space=pltpu.MemorySpace.SMEM),     # w2 (10,)
                pl.BlockSpec(memory_space=pltpu.MemorySpace.SMEM),     # b2 (1,)
            ],
            out_specs=pl.BlockSpec((tile_rows, LANES), lambda i: (i, 0)),
        ),
        compiler_params=pltpu.CompilerParams(
            dimension_semantics=("parallel",),   # batch tiles shard across TCs
        ),
    )(x_slab, w1, b1, w2, b2)

    if needs_pad:
        return out_slab.reshape(-1)[:B].reshape(B, 1)
    return out_slab.reshape(B, 1)


def init_params(key):
    # Deterministic init mimicking PyTorch Linear default:
    # U(-1/sqrt(fan_in), 1/sqrt(fan_in)). Stored as flat vectors.
    k1, k2, k3, k4 = jax.random.split(key, 4)
    bound1 = 1.0                      # fan_in of ln1 = 1
    bound2 = 1.0 / jnp.sqrt(10.0)     # fan_in of ln2 = 10
    w1 = jax.random.uniform(k1, (HIDDEN,), jnp.float32, -bound1, bound1)
    b1 = jax.random.uniform(k2, (HIDDEN,), jnp.float32, -bound1, bound1)
    w2 = jax.random.uniform(k3, (HIDDEN,), jnp.float32, -bound2, bound2)
    b2 = jax.random.uniform(k4, (1,), jnp.float32, -bound2, bound2)
    return w1, b1, w2, b2


if __name__ == "__main__":
    key = jax.random.PRNGKey(0)
    kx, kp = jax.random.split(key)

    w1, b1, w2, b2 = init_params(kp)

    # 1) Small batch, forced through the Pallas kernel (pad + slice path).
    B = 64
    x = jax.random.normal(kx, (B, 1), jnp.float32)
    out_pallas = jax.block_until_ready(
        phi_forward(x, w1, b1, w2, b2, min_pallas_batch=0))
    ref = phi_reference(x, w1, b1, w2, b2)
    assert out_pallas.shape == (B, 1)
    assert jnp.allclose(out_pallas, ref, atol=1e-5, rtol=1e-5), float(
        jnp.max(jnp.abs(out_pallas - ref)))

    # 2) Default path at small batch (pure-jnp fallback).
    out_default = jax.block_until_ready(phi_forward(x, w1, b1, w2, b2))
    assert jnp.allclose(out_default, ref, atol=1e-5, rtol=1e-5)

    # 3) Batch multiple of 128 (no pad / no slice) with a multi-step grid.
    B2 = 128 * 96     # rows=96 -> tile_rows=24 -> grid=(4,)
    x2 = jax.random.normal(kx, (B2, 1), jnp.float32)
    out2 = jax.block_until_ready(
        phi_forward(x2, w1, b1, w2, b2, min_pallas_batch=0))
    ref2 = phi_reference(x2, w1, b1, w2, b2)
    assert out2.shape == (B2, 1)
    assert jnp.allclose(out2, ref2, atol=1e-5, rtol=1e-5), float(
        jnp.max(jnp.abs(out2 - ref2)))

    print("KERNEL_OK")
</pallas_src>

<mosaic_0001>
module attributes {stable_mosaic.version = 11 : i64} {
  func.func @phi_kernel(%arg0: i32, %arg1: memref<1x128xf32, #tpu.memory_space<vmem>>, %arg2: memref<10xf32, #tpu.memory_space<smem>>, %arg3: memref<10xf32, #tpu.memory_space<smem>>, %arg4: memref<10xf32, #tpu.memory_space<smem>>, %arg5: memref<1xf32, #tpu.memory_space<smem>>, %arg6: memref<1x128xf32, #tpu.memory_space<vmem>>) attributes {dimension_semantics = [#tpu.dimension_semantics<parallel>], iteration_bounds = array<i64: 1>, scalar_prefetch = 0 : i64, scratch_operands = 0 : i64, tpu.core_type = #tpu.core_type<tc>, window_params = [{transform_indices = @transform_0, window_bounds = array<i64: 1, 128>}, {transform_indices = @transform_1, window_bounds = array<i64: 10>}, {transform_indices = @transform_2, window_bounds = array<i64: 10>}, {transform_indices = @transform_3, window_bounds = array<i64: 10>}, {transform_indices = @transform_4, window_bounds = array<i64: 1>}, {transform_indices = @transform_5, window_bounds = array<i64: 1, 128>}]} {
    %c0 = arith.constant 0 : index
    %c0_0 = arith.constant 0 : index
    %0 = vector.load %arg1[%c0, %c0_0] : memref<1x128xf32, #tpu.memory_space<vmem>>, vector<1x128xf32>
    %c0_1 = arith.constant 0 : index
    %1 = memref.load %arg2[%c0_1] : memref<10xf32, #tpu.memory_space<smem>>
    %2 = vector.broadcast %1 : f32 to vector<1x128xf32>
    %3 = arith.mulf %0, %2 : vector<1x128xf32>
    %c0_2 = arith.constant 0 : index
    %4 = memref.load %arg3[%c0_2] : memref<10xf32, #tpu.memory_space<smem>>
    %5 = vector.broadcast %4 : f32 to vector<1x128xf32>
    %6 = arith.addf %3, %5 : vector<1x128xf32>
    %cst = arith.constant 0.000000e+00 : f32
    %7 = vector.broadcast %cst : f32 to vector<1x128xf32>
    %8 = arith.maximumf %6, %7 : vector<1x128xf32>
    %c0_3 = arith.constant 0 : index
    %9 = memref.load %arg4[%c0_3] : memref<10xf32, #tpu.memory_space<smem>>
    %10 = vector.broadcast %9 : f32 to vector<1x128xf32>
    %11 = arith.mulf %8, %10 : vector<1x128xf32>
    %c0_4 = arith.constant 0 : index
    %12 = memref.load %arg5[%c0_4] : memref<1xf32, #tpu.memory_space<smem>>
    %13 = vector.broadcast %12 : f32 to vector<1x128xf32>
    %14 = arith.addf %11, %13 : vector<1x128xf32>
    %c1 = arith.constant 1 : index
    %15 = memref.load %arg2[%c1] : memref<10xf32, #tpu.memory_space<smem>>
    %16 = vector.broadcast %15 : f32 to vector<1x128xf32>
    %17 = arith.mulf %0, %16 : vector<1x128xf32>
    %c1_5 = arith.constant 1 : index
    %18 = memref.load %arg3[%c1_5] : memref<10xf32, #tpu.memory_space<smem>>
    %19 = vector.broadcast %18 : f32 to vector<1x128xf32>
    %20 = arith.addf %17, %19 : vector<1x128xf32>
    %cst_6 = arith.constant 0.000000e+00 : f32
    %21 = vector.broadcast %cst_6 : f32 to vector<1x128xf32>
    %22 = arith.maximumf %20, %21 : vector<1x128xf32>
    %c1_7 = arith.constant 1 : index
    %23 = memref.load %arg4[%c1_7] : memref<10xf32, #tpu.memory_space<smem>>
    %24 = vector.broadcast %23 : f32 to vector<1x128xf32>
    %25 = arith.mulf %22, %24 : vector<1x128xf32>
    %26 = arith.addf %14, %25 : vector<1x128xf32>
    %c2 = arith.constant 2 : index
    %27 = memref.load %arg2[%c2] : memref<10xf32, #tpu.memory_space<smem>>
    %28 = vector.broadcast %27 : f32 to vector<1x128xf32>
    %29 = arith.mulf %0, %28 : vector<1x128xf32>
    %c2_8 = arith.constant 2 : index
    %30 = memref.load %arg3[%c2_8] : memref<10xf32, #tpu.memory_space<smem>>
    %31 = vector.broadcast %30 : f32 to vector<1x128xf32>
    %32 = arith.addf %29, %31 : vector<1x128xf32>
    %cst_9 = arith.constant 0.000000e+00 : f32
    %33 = vector.broadcast %cst_9 : f32 to vector<1x128xf32>
    %34 = arith.maximumf %32, %33 : vector<1x128xf32>
    %c2_10 = arith.constant 2 : index
    %35 = memref.load %arg4[%c2_10] : memref<10xf32, #tpu.memory_space<smem>>
    %36 = vector.broadcast %35 : f32 to vector<1x128xf32>
    %37 = arith.mulf %34, %36 : vector<1x128xf32>
    %38 = arith.addf %26, %37 : vector<1x128xf32>
    %c3 = arith.constant 3 : index
    %39 = memref.load %arg2[%c3] : memref<10xf32, #tpu.memory_space<smem>>
    %40 = vector.broadcast %39 : f32 to vector<1x128xf32>
    %41 = arith.mulf %0, %40 : vector<1x128xf32>
    %c3_11 = arith.constant 3 : index
    %42 = memref.load %arg3[%c3_11] : memref<10xf32, #tpu.memory_space<smem>>
    %43 = vector.broadcast %42 : f32 to vector<1x128xf32>
    %44 = arith.addf %41, %43 : vector<1x128xf32>
    %cst_12 = arith.constant 0.000000e+00 : f32
    %45 = vector.broadcast %cst_12 : f32 to vector<1x128xf32>
    %46 = arith.maximumf %44, %45 : vector<1x128xf32>
    %c3_13 = arith.constant 3 : index
    %47 = memref.load %arg4[%c3_13] : memref<10xf32, #tpu.memory_space<smem>>
    %48 = vector.broadcast %47 : f32 to vector<1x128xf32>
    %49 = arith.mulf %46, %48 : vector<1x128xf32>
    %50 = arith.addf %38, %49 : vector<1x128xf32>
    %c4 = arith.constant 4 : index
    %51 = memref.load %arg2[%c4] : memref<10xf32, #tpu.memory_space<smem>>
    %52 = vector.broadcast %51 : f32 to vector<1x128xf32>
    %53 = arith.mulf %0, %52 : vector<1x128xf32>
    %c4_14 = arith.constant 4 : index
    %54 = memref.load %arg3[%c4_14] : memref<10xf32, #tpu.memory_space<smem>>
    %55 = vector.broadcast %54 : f32 to vector<1x128xf32>
    %56 = arith.addf %53, %55 : vector<1x128xf32>
    %cst_15 = arith.constant 0.000000e+00 : f32
    %57 = vector.broadcast %cst_15 : f32 to vector<1x128xf32>
    %58 = arith.maximumf %56, %57 : vector<1x128xf32>
    %c4_16 = arith.constant 4 : index
    %59 = memref.load %arg4[%c4_16] : memref<10xf32, #tpu.memory_space<smem>>
    %60 = vector.broadcast %59 : f32 to vector<1x128xf32>
    %61 = arith.mulf %58, %60 : vector<1x128xf32>
    %62 = arith.addf %50, %61 : vector<1x128xf32>
    %c5 = arith.constant 5 : index
    %63 = memref.load %arg2[%c5] : memref<10xf32, #tpu.memory_space<smem>>
    %64 = vector.broadcast %63 : f32 to vector<1x128xf32>
    %65 = arith.mulf %0, %64 : vector<1x128xf32>
    %c5_17 = arith.constant 5 : index
    %66 = memref.load %arg3[%c5_17] : memref<10xf32, #tpu.memory_space<smem>>
    %67 = vector.broadcast %66 : f32 to vector<1x128xf32>
    %68 = arith.addf %65, %67 : vector<1x128xf32>
    %cst_18 = arith.constant 0.000000e+00 : f32
    %69 = vector.broadcast %cst_18 : f32 to vector<1x128xf32>
    %70 = arith.maximumf %68, %69 : vector<1x128xf32>
    %c5_19 = arith.constant 5 : index
    %71 = memref.load %arg4[%c5_19] : memref<10xf32, #tpu.memory_space<smem>>
    %72 = vector.broadcast %71 : f32 to vector<1x128xf32>
    %73 = arith.mulf %70, %72 : vector<1x128xf32>
    %74 = arith.addf %62, %73 : vector<1x128xf32>
    %c6 = arith.constant 6 : index
    %75 = memref.load %arg2[%c6] : memref<10xf32, #tpu.memory_space<smem>>
    %76 = vector.broadcast %75 : f32 to vector<1x128xf32>
    %77 = arith.mulf %0, %76 : vector<1x128xf32>
    %c6_20 = arith.constant 6 : index
    %78 = memref.load %arg3[%c6_20] : memref<10xf32, #tpu.memory_space<smem>>
    %79 = vector.broadcast %78 : f32 to vector<1x128xf32>
    %80 = arith.addf %77, %79 : vector<1x128xf32>
    %cst_21 = arith.constant 0.000000e+00 : f32
    %81 = vector.broadcast %cst_21 : f32 to vector<1x128xf32>
    %82 = arith.maximumf %80, %81 : vector<1x128xf32>
    %c6_22 = arith.constant 6 : index
    %83 = memref.load %arg4[%c6_22] : memref<10xf32, #tpu.memory_space<smem>>
    %84 = vector.broadcast %83 : f32 to vector<1x128xf32>
    %85 = arith.mulf %82, %84 : vector<1x128xf32>
    %86 = arith.addf %74, %85 : vector<1x128xf32>
    %c7 = arith.constant 7 : index
    %87 = memref.load %arg2[%c7] : memref<10xf32, #tpu.memory_space<smem>>
    %88 = vector.broadcast %87 : f32 to vector<1x128xf32>
    %89 = arith.mulf %0, %88 : vector<1x128xf32>
    %c7_23 = arith.constant 7 : index
    %90 = memref.load %arg3[%c7_23] : memref<10xf32, #tpu.memory_space<smem>>
    %91 = vector.broadcast %90 : f32 to vector<1x128xf32>
    %92 = arith.addf %89, %91 : vector<1x128xf32>
    %cst_24 = arith.constant 0.000000e+00 : f32
    %93 = vector.broadcast %cst_24 : f32 to vector<1x128xf32>
    %94 = arith.maximumf %92, %93 : vector<1x128xf32>
    %c7_25 = arith.constant 7 : index
    %95 = memref.load %arg4[%c7_25] : memref<10xf32, #tpu.memory_space<smem>>
    %96 = vector.broadcast %95 : f32 to vector<1x128xf32>
    %97 = arith.mulf %94, %96 : vector<1x128xf32>
    %98 = arith.addf %86, %97 : vector<1x128xf32>
    %c8 = arith.constant 8 : index
    %99 = memref.load %arg2[%c8] : memref<10xf32, #tpu.memory_space<smem>>
    %100 = vector.broadcast %99 : f32 to vector<1x128xf32>
    %101 = arith.mulf %0, %100 : vector<1x128xf32>
    %c8_26 = arith.constant 8 : index
    %102 = memref.load %arg3[%c8_26] : memref<10xf32, #tpu.memory_space<smem>>
    %103 = vector.broadcast %102 : f32 to vector<1x128xf32>
    %104 = arith.addf %101, %103 : vector<1x128xf32>
    %cst_27 = arith.constant 0.000000e+00 : f32
    %105 = vector.broadcast %cst_27 : f32 to vector<1x128xf32>
    %106 = arith.maximumf %104, %105 : vector<1x128xf32>
    %c8_28 = arith.constant 8 : index
    %107 = memref.load %arg4[%c8_28] : memref<10xf32, #tpu.memory_space<smem>>
    %108 = vector.broadcast %107 : f32 to vector<1x128xf32>
    %109 = arith.mulf %106, %108 : vector<1x128xf32>
    %110 = arith.addf %98, %109 : vector<1x128xf32>
    %c9 = arith.constant 9 : index
    %111 = memref.load %arg2[%c9] : memref<10xf32, #tpu.memory_space<smem>>
    %112 = vector.broadcast %111 : f32 to vector<1x128xf32>
    %113 = arith.mulf %0, %112 : vector<1x128xf32>
    %c9_29 = arith.constant 9 : index
    %114 = memref.load %arg3[%c9_29] : memref<10xf32, #tpu.memory_space<smem>>
    %115 = vector.broadcast %114 : f32 to vector<1x128xf32>
    %116 = arith.addf %113, %115 : vector<1x128xf32>
    %cst_30 = arith.constant 0.000000e+00 : f32
    %117 = vector.broadcast %cst_30 : f32 to vector<1x128xf32>
    %118 = arith.maximumf %116, %117 : vector<1x128xf32>
    %c9_31 = arith.constant 9 : index
    %119 = memref.load %arg4[%c9_31] : memref<10xf32, #tpu.memory_space<smem>>
    %120 = vector.broadcast %119 : f32 to vector<1x128xf32>
    %121 = arith.mulf %118, %120 : vector<1x128xf32>
    %122 = arith.addf %110, %121 : vector<1x128xf32>
    %cst_32 = arith.constant 0.000000e+00 : f32
    %123 = vector.broadcast %cst_32 : f32 to vector<1x128xf32>
    %124 = arith.maximumf %122, %123 : vector<1x128xf32>
    %c0_33 = arith.constant 0 : index
    %c0_34 = arith.constant 0 : index
    %125 = vector.load %arg6[%c0_33, %c0_34] : memref<1x128xf32, #tpu.memory_space<vmem>>, vector<1x128xf32>
    tpu.vector_store %arg6[%c0_33, %c0_34], %124 {strides = array<i32>} : memref<1x128xf32, #tpu.memory_space<vmem>>, vector<1x128xf32>,
    return
  }
  func.func @transform_0(%arg0: i32) -> (i32, i32) {
    %c0_i32 = arith.constant 0 : i32
    %c0_i32_0 = arith.constant 0 : i32
    return %arg0, %c0_i32 : i32, i32
  }
  func.func @transform_1(%arg0: i32) -> i32 {
    %c0_i32 = arith.constant 0 : i32
    %c0_i32_0 = arith.constant 0 : i32
    return %c0_i32 : i32
  }
  func.func @transform_2(%arg0: i32) -> i32 {
    %c0_i32 = arith.constant 0 : i32
    %c0_i32_0 = arith.constant 0 : i32
    return %c0_i32 : i32
  }
  func.func @transform_3(%arg0: i32) -> i32 {
    %c0_i32 = arith.constant 0 : i32
    %c0_i32_0 = arith.constant 0 : i32
    return %c0_i32 : i32
  }
  func.func @transform_4(%arg0: i32) -> i32 {
    %c0_i32 = arith.constant 0 : i32
    %c0_i32_0 = arith.constant 0 : i32
    return %c0_i32 : i32
  }
  func.func @transform_5(%arg0: i32) -> (i32, i32) {
    %c0_i32 = arith.constant 0 : i32
    %c0_i32_0 = arith.constant 0 : i32
    return %arg0, %c0_i32 : i32, i32
  }
}

</mosaic_0001>

<llo_original>
// kernel: tpu_custom_call.1
$region0: #{tpu_custom_call.1}
  #allocation0 [shape = 'u32[]', space=smem, size = 0x4, offset = 0x4, fixed_abs, tag = 'smem constant byte address 0x4 - core index']
  #allocation1 [shape = 'u32[144,128]{1,0:T(1,128)}', space=vmem, size = 0x12000, scoped, tag = 'internal scratch']
  #allocation2 [shape = 'f32[1]{0:T(128)S(6)}', space=smem, size = 0x200, scoped, tag = 'scoped memory for tpu_custom_call.1']
  %s0 = inlined_call_operand.vmem [shape: f32[1,128], index: 0, kind: input, shape index: {}]
  %s1 = inlined_call_operand.vmem [shape: f32[10], index: 1, kind: input, shape index: {}]
  %s2 = inlined_call_operand.vmem [shape: f32[10], index: 2, kind: input, shape index: {}]
  %s3 = inlined_call_operand.vmem [shape: f32[10], index: 3, kind: input, shape index: {}]
  %s4 = inlined_call_operand.<no memory space> [shape: f32[1], index: 4, kind: input, shape index: {}]
  %s5 = inlined_call_operand.hbm [shape: f32[1,128], index: 5, kind: output, shape index: {}]
  %s6 = sld [smem:[#allocation0]]
  $region42: #{tpu_custom_call.1} parent=0
    _
  %s8 = ssub.s32 1, %s6
  %s9 = scalar_select 0, %s8, %s6
  %10 = sst [smem:[#allocation2]] %s4
  $region1: #{tpu_custom_call.1} parent=0
    #allocation3 [shape = 'u8[512]{0}', space=smem, size = 0x200, scoped, tag = 'input window, operand 1, single buffered']
    #allocation4 [shape = 's32[1]{0}', space=sflag, size = 0x4, scoped, tag = 'scoped memory for tpu_custom_call.1']
    #allocation5 [shape = 's32[1]{0}', space=sflag, size = 0x4, scoped, tag = 'scoped memory for tpu_custom_call.1']
    #allocation6 [shape = 'u8[512]{0}', space=smem, size = 0x200, scoped, tag = 'input window, operand 2, single buffered']
    #allocation7 [shape = 's32[1]{0}', space=sflag, size = 0x4, scoped, tag = 'scoped memory for tpu_custom_call.1']
    #allocation8 [shape = 'u8[512]{0}', space=smem, size = 0x200, scoped, tag = 'input window, operand 3, single buffered']
    #allocation9 [shape = 'u8[512]{0}', space=vmem, size = 0x400, scoped, tag = 'output window, operand 0, single buffered']
    %11 = vsyncpa [#allocation5], 0
    %12 = vsyncpa [#allocation7], 0
    %13 = vsyncpa [#allocation4], 0
    // Predicated region
    $region2: #{tpu_custom_call.1} parent=1 // pred_check
      _
    $region3: #{tpu_custom_call.1} parent=1 // pred_check_branch
      %15 = sbr.rel (0) target = $region5
    $region4: #{tpu_custom_call.1} parent=1 // pred_region
      _
    $region5: #{tpu_custom_call.1} parent=1 // pred_fallthru
      _
    // Predicated region
    $region6: #{tpu_custom_call.1} parent=1 // pred_check
      _
    $region7: #{tpu_custom_call.1} parent=1 // pred_check_branch
      %17 = sbr.rel (0) target = $region9
    $region8: #{tpu_custom_call.1} parent=1 // pred_region
      %s19 = ssub.s32 16, 16
      %20 = vsyncadd [#allocation5], %s19
      %s22 = sshll.u32 %s1, 4
      %s23 = int_to_ptr.vmem [resolvable:$true] %s22
      %25 = dma.vmem_to_smem %s23, 16, [#allocation3], [#allocation5]
    $region9: #{tpu_custom_call.1} parent=1 // pred_fallthru
      _
    // Predicated region
    $region10: #{tpu_custom_call.1} parent=1 // pred_check
      _
    $region11: #{tpu_custom_call.1} parent=1 // pred_check_branch
      %27 = sbr.rel (0) target = $region13
    $region12: #{tpu_custom_call.1} parent=1 // pred_region
      %s29 = ssub.s32 16, 16
      %30 = vsyncadd [#allocation7], %s29
      %s32 = sshll.u32 %s2, 4
      %s33 = int_to_ptr.vmem [resolvable:$true] %s32
      %35 = dma.vmem_to_smem %s33, 16, [#allocation6], [#allocation7]
    $region13: #{tpu_custom_call.1} parent=1 // pred_fallthru
      _
    // Predicated region
    $region14: #{tpu_custom_call.1} parent=1 // pred_check
      _
    $region15: #{tpu_custom_call.1} parent=1 // pred_check_branch
      %37 = sbr.rel (0) target = $region17
    $region16: #{tpu_custom_call.1} parent=1 // pred_region
      %s39 = ssub.s32 16, 16
      %40 = vsyncadd [#allocation7], %s39
      %s42 = sshll.u32 %s3, 4
      %s43 = int_to_ptr.vmem [resolvable:$true] %s42
      %45 = dma.vmem_to_smem %s43, 16, [#allocation8], [#allocation7]
    $region17: #{tpu_custom_call.1} parent=1 // pred_fallthru
      _
    // Predicated region
    $region18: #{tpu_custom_call.1} parent=1 // pred_check
      _
    $region19: #{tpu_custom_call.1} parent=1 // pred_check_branch
      %47 = sbr.rel (0) target = $region21
    $region20: #{tpu_custom_call.1} parent=1 // pred_region
      _
    $region21: #{tpu_custom_call.1} parent=1 // pred_fallthru
      _
    // Predicated region
    $region22: #{tpu_custom_call.1} parent=1 // pred_check
      _
    $region23: #{tpu_custom_call.1} parent=1 // pred_check_branch
      %49 = sbr.rel (0) target = $region25
    $region24: #{tpu_custom_call.1} parent=1 // pred_region
      %50 = dma.done [#allocation5], 16
    $region25: #{tpu_custom_call.1} parent=1 // pred_fallthru
      _
    // Predicated region
    $region26: #{tpu_custom_call.1} parent=1 // pred_check
      _
    $region27: #{tpu_custom_call.1} parent=1 // pred_check_branch
      %52 = sbr.rel (0) target = $region29
    $region28: #{tpu_custom_call.1} parent=1 // pred_region
      %53 = dma.done [#allocation7], 16
    $region29: #{tpu_custom_call.1} parent=1 // pred_fallthru
      _
    // Predicated region
    $region30: #{tpu_custom_call.1} parent=1 // pred_check
      _
    $region31: #{tpu_custom_call.1} parent=1 // pred_check_branch
      %55 = sbr.rel (0) target = $region33
    $region32: #{tpu_custom_call.1} parent=1 // pred_region
      %56 = dma.done [#allocation7], 16
    $region33: #{tpu_custom_call.1} parent=1 // pred_fallthru
      _
    %57 = sfence
    %v58 = vld [vmem:[%s0] sm:$0x1]
    %s59 = sld [smem:[#allocation3]]
    %v60 = vstv %s59
    %v61 = vmul.f32 %v58, %v60
    %s62 = sld [smem:[#allocation6]]
    %v63 = vstv %s62
    %v64 = vadd.f32 %v61, %v63
    %v65 = vmax.f32 %v64, 0.0
    %s66 = sld [smem:[#allocation8]]
    %v67 = vstv %s66
    %v68 = vmul.f32 %v65, %v67
    %s69 = sld [smem:[#allocation2]]
    %v70 = vstv %s69
    %v71 = vadd.f32 %v68, %v70
    %s72 = sld [smem:[#allocation3 + $0x1]]
    %v73 = vstv %s72
    %v74 = vmul.f32 %v58, %v73
    %s75 = sld [smem:[#allocation6 + $0x1]]
    %v76 = vstv %s75
    %v77 = vadd.f32 %v74, %v76
    %v78 = vmax.f32 %v77, 0.0
    %s79 = sld [smem:[#allocation8 + $0x1]]
    %v80 = vstv %s79
    %v81 = vmul.f32 %v78, %v80
    %v82 = vadd.f32 %v71, %v81
    %s83 = sld [smem:[#allocation3 + $0x2]]
    %v84 = vstv %s83
    %v85 = vmul.f32 %v58, %v84
    %s86 = sld [smem:[#allocation6 + $0x2]]
    %v87 = vstv %s86
    %v88 = vadd.f32 %v85, %v87
    %v89 = vmax.f32 %v88, 0.0
    %s90 = sld [smem:[#allocation8 + $0x2]]
    %v91 = vstv %s90
    %v92 = vmul.f32 %v89, %v91
    %v93 = vadd.f32 %v82, %v92
    %s94 = sld [smem:[#allocation3 + $0x3]]
    %v95 = vstv %s94
    %v96 = vmul.f32 %v58, %v95
    %s97 = sld [smem:[#allocation6 + $0x3]]
    %v98 = vstv %s97
    %v99 = vadd.f32 %v96, %v98
    %v100 = vmax.f32 %v99, 0.0
    %s101 = sld [smem:[#allocation8 + $0x3]]
    %v102 = vstv %s101
    %v103 = vmul.f32 %v100, %v102
    %v104 = vadd.f32 %v93, %v103
    %s105 = sld [smem:[#allocation3 + $0x4]]
    %v106 = vstv %s105
    %v107 = vmul.f32 %v58, %v106
    %s108 = sld [smem:[#allocation6 + $0x4]]
    %v109 = vstv %s108
    %v110 = vadd.f32 %v107, %v109
    %v111 = vmax.f32 %v110, 0.0
    %s112 = sld [smem:[#allocation8 + $0x4]]
    %v113 = vstv %s112
    %v114 = vmul.f32 %v111, %v113
    %v115 = vadd.f32 %v104, %v114
    %s116 = sld [smem:[#allocation3 + $0x5]]
    %v117 = vstv %s116
    %v118 = vmul.f32 %v58, %v117
    %s119 = sld [smem:[#allocation6 + $0x5]]
    %v120 = vstv %s119
    %v121 = vadd.f32 %v118, %v120
    %v122 = vmax.f32 %v121, 0.0
    %s123 = sld [smem:[#allocation8 + $0x5]]
    %v124 = vstv %s123
    %v125 = vmul.f32 %v122, %v124
    %v126 = vadd.f32 %v115, %v125
    %s127 = sld [smem:[#allocation3 + $0x6]]
    %v128 = vstv %s127
    %v129 = vmul.f32 %v58, %v128
    %s130 = sld [smem:[#allocation6 + $0x6]]
    %v131 = vstv %s130
    %v132 = vadd.f32 %v129, %v131
    %v133 = vmax.f32 %v132, 0.0
    %s134 = sld [smem:[#allocation8 + $0x6]]
    %v135 = vstv %s134
    %v136 = vmul.f32 %v133, %v135
    %v137 = vadd.f32 %v126, %v136
    %s138 = sld [smem:[#allocation3 + $0x7]]
    %v139 = vstv %s138
    %v140 = vmul.f32 %v58, %v139
    %s141 = sld [smem:[#allocation6 + $0x7]]
    %v142 = vstv %s141
    %v143 = vadd.f32 %v140, %v142
    %v144 = vmax.f32 %v143, 0.0
    %s145 = sld [smem:[#allocation8 + $0x7]]
    %v146 = vstv %s145
    %v147 = vmul.f32 %v144, %v146
    %v148 = vadd.f32 %v137, %v147
    %s149 = sld [smem:[#allocation3 + $0x8]]
    %v150 = vstv %s149
    %v151 = vmul.f32 %v58, %v150
    %s152 = sld [smem:[#allocation6 + $0x8]]
    %v153 = vstv %s152
    %v154 = vadd.f32 %v151, %v153
    %v155 = vmax.f32 %v154, 0.0
    %s156 = sld [smem:[#allocation8 + $0x8]]
    %v157 = vstv %s156
    %v158 = vmul.f32 %v155, %v157
    %v159 = vadd.f32 %v148, %v158
    %s160 = sld [smem:[#allocation3 + $0x9]]
    %v161 = vstv %s160
    %v162 = vmul.f32 %v58, %v161
    %s163 = sld [smem:[#allocation6 + $0x9]]
    %v164 = vstv %s163
    %v165 = vadd.f32 %v162, %v164
    %v166 = vmax.f32 %v165, 0.0
    %s167 = sld [smem:[#allocation8 + $0x9]]
    %v168 = vstv %s167
    %v169 = vmul.f32 %v166, %v168
    %v170 = vadd.f32 %v159, %v169
    %v171 = vmax.f32 %v170, 0.0
    %172 = vst [vmem:[#allocation9] sm:$0x1] %v171
    // Predicated region
    $region34: #{tpu_custom_call.1} parent=1 // pred_check
      _
    $region35: #{tpu_custom_call.1} parent=1 // pred_check_branch
      %174 = sbr.rel (0) target = $region37
    $region36: #{tpu_custom_call.1} parent=1 // pred_region
      %s176 = ssub.s32 16, 16
      %177 = vsyncadd [#allocation4], %s176
      %s179 = sshll.u32 [#allocation9], 4
      %s180 = int_to_ptr.vmem [resolvable:$true] %s179
      %182 = dma.vmem_to_hbm [thread:$0]  %s180, 16, %s5, [#allocation4]
    $region37: #{tpu_custom_call.1} parent=1 // pred_fallthru
      _
    // Predicated region
    $region38: #{tpu_custom_call.1} parent=1 // pred_check
      _
    $region39: #{tpu_custom_call.1} parent=1 // pred_check_branch
      %184 = sbr.rel (0) target = $region41
    $region40: #{tpu_custom_call.1} parent=1 // pred_region
      %185 = dma.done [#allocation4], 16
    $region41: #{tpu_custom_call.1} parent=1 // pred_fallthru
      _
    %186 = vsyncpa [#allocation4], 1
    %187 = vsyncpa [#allocation5], 1
    %188 = vsyncpa [#allocation7], 1

</llo_original>
